<compile_context>
chip_gen: v6e
topology: v6e:2x2x1
jax: 0.10.0
libtpu: 0.0.40
codegen_flags: <defaults>
</compile_context>

<pallas_src>
import jax
import jax.numpy as jnp
from jax import lax
from jax.experimental import pallas as pl
from jax.experimental.pallas import tpu as pltpu  # noqa: F401  (TPU backend)


# ------------------------- fused Model kernel -------------------------
def _fused_gcn_linkpred_kernel(a_ref, x_ref, w_ref, b_ref,
                               psrc_ref, pdst_ref, nsrc_ref, ndst_ref,
                               pos_ref, neg_ref):
    # ---- GCN layer, computed directly in transposed layout (Fout, N) ----
    # wx[f, u] = sum_i W[f, i] * X[u, i]
    wx = lax.dot_general(w_ref[...], x_ref[...],
                         (((1,), (1,)), ((), ())),
                         preferred_element_type=jnp.float32)          # (Fout, N)
    # hT[f, v] = sum_u wx[f, u] * A[v, u]   (A[v, u] = weight of edge u->v)
    h_t = lax.dot_general(wx, a_ref[...],
                          (((1,), (1,)), ((), ())),
                          preferred_element_type=jnp.float32)         # (Fout, N)
    h_t = h_t + b_ref[...]                                            # (Fout,1) lane-broadcast bias

    n = a_ref.shape[0]

    def edge_scores(src_row, dst_row, out_ref):
        # edges on the lane axis -> lane-dense output slab
        e = out_ref.shape[-1]
        node_iota = lax.broadcasted_iota(jnp.int32, (n, e), 0)
        src_oh = (node_iota == src_row).astype(jnp.float32)           # (N, E)
        dst_oh = (node_iota == dst_row).astype(jnp.float32)           # (N, E)
        hs = jnp.dot(h_t, src_oh, preferred_element_type=jnp.float32)  # (Fout, E)
        hd = jnp.dot(h_t, dst_oh, preferred_element_type=jnp.float32)  # (Fout, E)
        out_ref[...] = jnp.sum(hs * hd, axis=0, keepdims=True)        # (1, E)

    edge_scores(psrc_ref[...], pdst_ref[...], pos_ref)   # self.pred(g, h)
    edge_scores(nsrc_ref[...], ndst_ref[...], neg_ref)   # self.pred(neg_g, h)


def model_forward(a_pos, pos_src, pos_dst, neg_src, neg_dst, x, w, b):
    """Model.forward: h = GCNLayer(g, x); return (u_dot_v on g, u_dot_v on neg_g)."""
    n, fin = x.shape
    fout = w.shape[0]
    e_pos = pos_src.shape[0]
    e_neg = neg_src.shape[0]

    # glue: trivial reshapes only (no wrapper transposes, no extra gathers)
    b_col = b.reshape(fout, 1)
    psrc = pos_src.astype(jnp.int32).reshape(1, e_pos)
    pdst = pos_dst.astype(jnp.int32).reshape(1, e_pos)
    nsrc = neg_src.astype(jnp.int32).reshape(1, e_neg)
    ndst = neg_dst.astype(jnp.int32).reshape(1, e_neg)

    def full(shape):
        return pl.BlockSpec(shape, lambda i: (0,) * len(shape))

    pos_row, neg_row = pl.pallas_call(
        _fused_gcn_linkpred_kernel,
        out_shape=(jax.ShapeDtypeStruct((1, e_pos), jnp.float32),
                   jax.ShapeDtypeStruct((1, e_neg), jnp.float32)),
        grid=(1,),
        in_specs=[
            full((n, n)),        # A  (dense weighted adjacency, A[dst, src])
            full((n, fin)),      # X
            full((fout, fin)),   # W  (native nn.Linear orientation)
            full((fout, 1)),     # b
            full((1, e_pos)),    # pos src ids
            full((1, e_pos)),    # pos dst ids
            full((1, e_neg)),    # neg src ids
            full((1, e_neg)),    # neg dst ids
        ],
        out_specs=(full((1, e_pos)), full((1, e_neg))),
    )(a_pos, x, w, b_col, psrc, pdst, nsrc, ndst)

    # DGL apply_edges(u_dot_v) returns shape [E, 1]
    return pos_row.reshape(e_pos, 1), neg_row.reshape(e_neg, 1)


if __name__ == "__main__":
    key = jax.random.PRNGKey(0)
    N, FIN, FOUT = 64, 32, 16          # in_features=32, out_features=16 (hidden unused)
    E_POS, E_NEG = 256, 256

    ks = jax.random.split(key, 8)
    x = jax.random.normal(ks[0], (N, FIN), jnp.float32)
    w = jax.random.normal(ks[1], (FOUT, FIN), jnp.float32) * 0.1   # nn.Linear weight
    b = jax.random.normal(ks[2], (FOUT,), jnp.float32) * 0.1       # nn.Linear bias

    # positive graph g: edge list + edge weights
    pos_src = jax.random.randint(ks[3], (E_POS,), 0, N)
    pos_dst = jax.random.randint(ks[4], (E_POS,), 0, N)
    e_weight = jax.random.uniform(ks[5], (E_POS,), jnp.float32)

    # negative graph neg_g: edge list only (used for scoring)
    neg_src = jax.random.randint(ks[6], (E_NEG,), 0, N)
    neg_dst = jax.random.randint(ks[7], (E_NEG,), 0, N)

    # dense weighted adjacency: A[dst, src] = sum of weights of (src -> dst) edges
    a_pos = jnp.zeros((N, N), jnp.float32).at[pos_dst, pos_src].add(e_weight)

    pos_score, neg_score = model_forward(a_pos, pos_src, pos_dst,
                                         neg_src, neg_dst, x, w, b)
    jax.block_until_ready((pos_score, neg_score))

    # silent correctness check against a plain-JAX reference
    h_ref = (a_pos @ x) @ w.T + b
    pos_ref = jnp.sum(h_ref[pos_src] * h_ref[pos_dst], axis=-1, keepdims=True)
    neg_ref = jnp.sum(h_ref[neg_src] * h_ref[neg_dst], axis=-1, keepdims=True)
    assert pos_score.shape == (E_POS, 1) and neg_score.shape == (E_NEG, 1)
    assert jnp.allclose(pos_score, pos_ref, atol=1e-3, rtol=1e-3)
    assert jnp.allclose(neg_score, neg_ref, atol=1e-3, rtol=1e-3)

    print("KERNEL_OK")
</pallas_src>

<mosaic_0001>
module attributes {stable_mosaic.version = 11 : i64} {
  func.func @_fused_gcn_linkpred_kernel(%arg0: i32, %arg1: memref<64x64xf32, #tpu.memory_space<vmem>>, %arg2: memref<64x32xf32, #tpu.memory_space<vmem>>, %arg3: memref<16x32xf32, #tpu.memory_space<vmem>>, %arg4: memref<16x1xf32, #tpu.memory_space<vmem>>, %arg5: memref<1x256xi32, #tpu.memory_space<vmem>>, %arg6: memref<1x256xi32, #tpu.memory_space<vmem>>, %arg7: memref<1x256xi32, #tpu.memory_space<vmem>>, %arg8: memref<1x256xi32, #tpu.memory_space<vmem>>, %arg9: memref<1x256xf32, #tpu.memory_space<vmem>>, %arg10: memref<1x256xf32, #tpu.memory_space<vmem>>) attributes {dimension_semantics = [#tpu.dimension_semantics<arbitrary>], iteration_bounds = array<i64: 1>, scalar_prefetch = 0 : i64, scratch_operands = 0 : i64, tpu.core_type = #tpu.core_type<tc>, window_params = [{pipeline_mode = #tpu.pipeline_mode<synchronous>, transform_indices = @transform_0, window_bounds = array<i64: 64, 64>}, {pipeline_mode = #tpu.pipeline_mode<synchronous>, transform_indices = @transform_1, window_bounds = array<i64: 64, 32>}, {pipeline_mode = #tpu.pipeline_mode<synchronous>, transform_indices = @transform_2, window_bounds = array<i64: 16, 32>}, {pipeline_mode = #tpu.pipeline_mode<synchronous>, transform_indices = @transform_3, window_bounds = array<i64: 16, 1>}, {pipeline_mode = #tpu.pipeline_mode<synchronous>, transform_indices = @transform_4, window_bounds = array<i64: 1, 256>}, {pipeline_mode = #tpu.pipeline_mode<synchronous>, transform_indices = @transform_5, window_bounds = array<i64: 1, 256>}, {pipeline_mode = #tpu.pipeline_mode<synchronous>, transform_indices = @transform_6, window_bounds = array<i64: 1, 256>}, {pipeline_mode = #tpu.pipeline_mode<synchronous>, transform_indices = @transform_7, window_bounds = array<i64: 1, 256>}, {pipeline_mode = #tpu.pipeline_mode<synchronous>, transform_indices = @transform_8, window_bounds = array<i64: 1, 256>}, {pipeline_mode = #tpu.pipeline_mode<synchronous>, transform_indices = @transform_9, window_bounds = array<i64: 1, 256>}]} {
    %c0 = arith.constant 0 : index
    %c0_0 = arith.constant 0 : index
    %0 = vector.load %arg3[%c0, %c0_0] : memref<16x32xf32, #tpu.memory_space<vmem>>, vector<16x32xf32>
    %c0_1 = arith.constant 0 : index
    %c0_2 = arith.constant 0 : index
    %1 = vector.load %arg2[%c0_1, %c0_2] : memref<64x32xf32, #tpu.memory_space<vmem>>, vector<64x32xf32>
    %cst = arith.constant dense<0.000000e+00> : vector<16x64xf32>
    %2 = tpu.matmul %0, %1, %cst {dimension_numbers = #tpu.dot_dimension_numbers<[1], [1], [0], [0], [0, 0, 1, 0], [], []>} : vector<16x32xf32>, vector<64x32xf32>, vector<16x64xf32> -> vector<16x64xf32>
    %c0_3 = arith.constant 0 : index
    %c0_4 = arith.constant 0 : index
    %3 = vector.load %arg1[%c0_3, %c0_4] : memref<64x64xf32, #tpu.memory_space<vmem>>, vector<64x64xf32>
    %cst_5 = arith.constant dense<0.000000e+00> : vector<16x64xf32>
    %4 = tpu.matmul %2, %3, %cst_5 {dimension_numbers = #tpu.dot_dimension_numbers<[1], [1], [0], [0], [0, 0, 1, 0], [], []>} : vector<16x64xf32>, vector<64x64xf32>, vector<16x64xf32> -> vector<16x64xf32>
    %c0_6 = arith.constant 0 : index
    %c0_7 = arith.constant 0 : index
    %5 = vector.load %arg4[%c0_6, %c0_7] : memref<16x1xf32, #tpu.memory_space<vmem>>, vector<16x1xf32>
    %6 = vector.broadcast %5 : vector<16x1xf32> to vector<16x64xf32>
    %7 = arith.addf %4, %6 : vector<16x64xf32>
    %c0_8 = arith.constant 0 : index
    %c0_9 = arith.constant 0 : index
    %8 = vector.load %arg5[%c0_8, %c0_9] : memref<1x256xi32, #tpu.memory_space<vmem>>, vector<1x256xi32>
    %c0_10 = arith.constant 0 : index
    %c0_11 = arith.constant 0 : index
    %9 = vector.load %arg6[%c0_10, %c0_11] : memref<1x256xi32, #tpu.memory_space<vmem>>, vector<1x256xi32>
    %10 = tpu.iota {dimensions = array<i32: 0>} : vector<64x256xi32>
    %11 = vector.broadcast %8 : vector<1x256xi32> to vector<64x256xi32>
    %12 = arith.cmpi eq, %10, %11 : vector<64x256xi32>
    %13 = arith.extui %12 : vector<64x256xi1> to vector<64x256xi32>
    %14 = arith.sitofp %13 : vector<64x256xi32> to vector<64x256xf32>
    %15 = vector.broadcast %9 : vector<1x256xi32> to vector<64x256xi32>
    %16 = arith.cmpi eq, %10, %15 : vector<64x256xi32>
    %17 = arith.extui %16 : vector<64x256xi1> to vector<64x256xi32>
    %18 = arith.sitofp %17 : vector<64x256xi32> to vector<64x256xf32>
    %cst_12 = arith.constant dense<0.000000e+00> : vector<16x256xf32>
    %19 = tpu.matmul %7, %14, %cst_12 {dimension_numbers = #tpu.dot_dimension_numbers<[1], [0], [0], [1], [0, 0, 1, 1], [], []>} : vector<16x64xf32>, vector<64x256xf32>, vector<16x256xf32> -> vector<16x256xf32>
    %cst_13 = arith.constant dense<0.000000e+00> : vector<16x256xf32>
    %20 = tpu.matmul %7, %18, %cst_13 {dimension_numbers = #tpu.dot_dimension_numbers<[1], [0], [0], [1], [0, 0, 1, 1], [], []>} : vector<16x64xf32>, vector<64x256xf32>, vector<16x256xf32> -> vector<16x256xf32>
    %21 = arith.mulf %19, %20 : vector<16x256xf32>
    %cst_14 = arith.constant dense<0.000000e+00> : vector<256xf32>
    %22 = vector.multi_reduction <add>, %21, %cst_14 [0] : vector<16x256xf32> to vector<256xf32>
    %23 = vector.shape_cast %22 : vector<256xf32> to vector<1x256xf32>
    %c0_15 = arith.constant 0 : index
    %c0_16 = arith.constant 0 : index
    %24 = vector.load %arg9[%c0_15, %c0_16] : memref<1x256xf32, #tpu.memory_space<vmem>>, vector<1x256xf32>
    tpu.vector_store %arg9[%c0_15, %c0_16], %23 {strides = array<i32>} : memref<1x256xf32, #tpu.memory_space<vmem>>, vector<1x256xf32>,
    %c0_17 = arith.constant 0 : index
    %c0_18 = arith.constant 0 : index
    %25 = vector.load %arg7[%c0_17, %c0_18] : memref<1x256xi32, #tpu.memory_space<vmem>>, vector<1x256xi32>
    %c0_19 = arith.constant 0 : index
    %c0_20 = arith.constant 0 : index
    %26 = vector.load %arg8[%c0_19, %c0_20] : memref<1x256xi32, #tpu.memory_space<vmem>>, vector<1x256xi32>
    %27 = tpu.iota {dimensions = array<i32: 0>} : vector<64x256xi32>
    %28 = vector.broadcast %25 : vector<1x256xi32> to vector<64x256xi32>
    %29 = arith.cmpi eq, %27, %28 : vector<64x256xi32>
    %30 = arith.extui %29 : vector<64x256xi1> to vector<64x256xi32>
    %31 = arith.sitofp %30 : vector<64x256xi32> to vector<64x256xf32>
    %32 = vector.broadcast %26 : vector<1x256xi32> to vector<64x256xi32>
    %33 = arith.cmpi eq, %27, %32 : vector<64x256xi32>
    %34 = arith.extui %33 : vector<64x256xi1> to vector<64x256xi32>
    %35 = arith.sitofp %34 : vector<64x256xi32> to vector<64x256xf32>
    %cst_21 = arith.constant dense<0.000000e+00> : vector<16x256xf32>
    %36 = tpu.matmul %7, %31, %cst_21 {dimension_numbers = #tpu.dot_dimension_numbers<[1], [0], [0], [1], [0, 0, 1, 1], [], []>} : vector<16x64xf32>, vector<64x256xf32>, vector<16x256xf32> -> vector<16x256xf32>
    %cst_22 = arith.constant dense<0.000000e+00> : vector<16x256xf32>
    %37 = tpu.matmul %7, %35, %cst_22 {dimension_numbers = #tpu.dot_dimension_numbers<[1], [0], [0], [1], [0, 0, 1, 1], [], []>} : vector<16x64xf32>, vector<64x256xf32>, vector<16x256xf32> -> vector<16x256xf32>
    %38 = arith.mulf %36, %37 : vector<16x256xf32>
    %cst_23 = arith.constant dense<0.000000e+00> : vector<256xf32>
    %39 = vector.multi_reduction <add>, %38, %cst_23 [0] : vector<16x256xf32> to vector<256xf32>
    %40 = vector.shape_cast %39 : vector<256xf32> to vector<1x256xf32>
    %c0_24 = arith.constant 0 : index
    %c0_25 = arith.constant 0 : index
    %41 = vector.load %arg10[%c0_24, %c0_25] : memref<1x256xf32, #tpu.memory_space<vmem>>, vector<1x256xf32>
    tpu.vector_store %arg10[%c0_24, %c0_25], %40 {strides = array<i32>} : memref<1x256xf32, #tpu.memory_space<vmem>>, vector<1x256xf32>,
    return
  }
  func.func @transform_0(%arg0: i32) -> (i32, i32) {
    %c0_i32 = arith.constant 0 : i32
    %c0_i32_0 = arith.constant 0 : i32
    %c0_i32_1 = arith.constant 0 : i32
    return %c0_i32, %c0_i32_0 : i32, i32
  }
  func.func @transform_1(%arg0: i32) -> (i32, i32) {
    %c0_i32 = arith.constant 0 : i32
    %c0_i32_0 = arith.constant 0 : i32
    %c0_i32_1 = arith.constant 0 : i32
    return %c0_i32, %c0_i32_0 : i32, i32
  }
  func.func @transform_2(%arg0: i32) -> (i32, i32) {
    %c0_i32 = arith.constant 0 : i32
    %c0_i32_0 = arith.constant 0 : i32
    %c0_i32_1 = arith.constant 0 : i32
    return %c0_i32, %c0_i32_0 : i32, i32
  }
  func.func @transform_3(%arg0: i32) -> (i32, i32) {
    %c0_i32 = arith.constant 0 : i32
    %c0_i32_0 = arith.constant 0 : i32
    %c0_i32_1 = arith.constant 0 : i32
    return %c0_i32, %c0_i32_0 : i32, i32
  }
  func.func @transform_4(%arg0: i32) -> (i32, i32) {
    %c0_i32 = arith.constant 0 : i32
    %c0_i32_0 = arith.constant 0 : i32
    %c0_i32_1 = arith.constant 0 : i32
    return %c0_i32, %c0_i32_0 : i32, i32
  }
  func.func @transform_5(%arg0: i32) -> (i32, i32) {
    %c0_i32 = arith.constant 0 : i32
    %c0_i32_0 = arith.constant 0 : i32
    %c0_i32_1 = arith.constant 0 : i32
    return %c0_i32, %c0_i32_0 : i32, i32
  }
  func.func @transform_6(%arg0: i32) -> (i32, i32) {
    %c0_i32 = arith.constant 0 : i32
    %c0_i32_0 = arith.constant 0 : i32
    %c0_i32_1 = arith.constant 0 : i32
    return %c0_i32, %c0_i32_0 : i32, i32
  }
  func.func @transform_7(%arg0: i32) -> (i32, i32) {
    %c0_i32 = arith.constant 0 : i32
    %c0_i32_0 = arith.constant 0 : i32
    %c0_i32_1 = arith.constant 0 : i32
    return %c0_i32, %c0_i32_0 : i32, i32
  }
  func.func @transform_8(%arg0: i32) -> (i32, i32) {
    %c0_i32 = arith.constant 0 : i32
    %c0_i32_0 = arith.constant 0 : i32
    %c0_i32_1 = arith.constant 0 : i32
    return %c0_i32, %c0_i32_0 : i32, i32
  }
  func.func @transform_9(%arg0: i32) -> (i32, i32) {
    %c0_i32 = arith.constant 0 : i32
    %c0_i32_0 = arith.constant 0 : i32
    %c0_i32_1 = arith.constant 0 : i32
    return %c0_i32, %c0_i32_0 : i32, i32
  }
}

</mosaic_0001>

<llo_original>
// kernel: tpu_custom_call.1
$region0: #{tpu_custom_call.1}
  #allocation0 [shape = 'u32[]', space=smem, size = 0x4, offset = 0x4, fixed_abs, tag = 'smem constant byte address 0x4 - core index']
  #allocation1 [shape = 'u32[144,128]{1,0:T(1,128)}', space=vmem, size = 0x12000, scoped, tag = 'internal scratch']
  %s0 = inlined_call_operand.vmem [shape: f32[64,64], index: 0, kind: input, shape index: {}]
  %s1 = inlined_call_operand.vmem [shape: f32[64,32], index: 1, kind: input, shape index: {}]
  %s2 = inlined_call_operand.vmem [shape: f32[16,32], index: 2, kind: input, shape index: {}]
  %s3 = inlined_call_operand.vmem [shape: f32[16,1], index: 3, kind: input, shape index: {}]
  %s4 = inlined_call_operand.vmem [shape: s32[1,256], index: 4, kind: input, shape index: {}]
  %s5 = inlined_call_operand.vmem [shape: s32[1,256], index: 5, kind: input, shape index: {}]
  %s6 = inlined_call_operand.vmem [shape: s32[1,256], index: 6, kind: input, shape index: {}]
  %s7 = inlined_call_operand.vmem [shape: s32[1,256], index: 7, kind: input, shape index: {}]
  %s8 = inlined_call_operand.hbm [shape: f32[1,256], index: 8, kind: output, shape index: {0}]
  %s9 = inlined_call_operand.hbm [shape: f32[1,256], index: 9, kind: output, shape index: {1}]
  %10 = xla_tuple %s8, %s9
  %s11 = sld [smem:[#allocation0]]
  $region50: #{tpu_custom_call.1} parent=0
    _
  %s13 = ssub.s32 1, %s11
  %s14 = scalar_select 0, %s13, %s11
  $region1: #{tpu_custom_call.1} parent=0
    #allocation2 [shape = 'u8[1024]{0}', space=vmem, size = 0x400, scoped, tag = 'output window, operand 0, single buffered']
    #allocation3 [shape = 's32[1]{0}', space=sflag, size = 0x4, scoped, tag = 'scoped memory for tpu_custom_call.1']
    #allocation4 [shape = 'u8[1024]{0}', space=vmem, size = 0x400, scoped, tag = 'output window, operand 1, single buffered']
    #allocation5 [shape = 's32[1]{0}', space=sflag, size = 0x4, scoped, tag = 'scoped memory for tpu_custom_call.1']
    %15 = vsyncpa [#allocation3], 0
    %16 = vsyncpa [#allocation5], 0
    // Predicated region
    $region2: #{tpu_custom_call.1} parent=1 // pred_check
      _
    $region3: #{tpu_custom_call.1} parent=1 // pred_check_branch
      %18 = sbr.rel (0) target = $region5
    $region4: #{tpu_custom_call.1} parent=1 // pred_region
      _
    $region5: #{tpu_custom_call.1} parent=1 // pred_fallthru
      _
    // Predicated region
    $region6: #{tpu_custom_call.1} parent=1 // pred_check
      _
    $region7: #{tpu_custom_call.1} parent=1 // pred_check_branch
      %20 = sbr.rel (0) target = $region9
    $region8: #{tpu_custom_call.1} parent=1 // pred_region
      _
    $region9: #{tpu_custom_call.1} parent=1 // pred_fallthru
      _
    // Predicated region
    $region10: #{tpu_custom_call.1} parent=1 // pred_check
      _
    $region11: #{tpu_custom_call.1} parent=1 // pred_check_branch
      %22 = sbr.rel (0) target = $region13
    $region12: #{tpu_custom_call.1} parent=1 // pred_region
      _
    $region13: #{tpu_custom_call.1} parent=1 // pred_fallthru
      _
    // Predicated region
    $region14: #{tpu_custom_call.1} parent=1 // pred_check
      _
    $region15: #{tpu_custom_call.1} parent=1 // pred_check_branch
      %24 = sbr.rel (0) target = $region17
    $region16: #{tpu_custom_call.1} parent=1 // pred_region
      _
    $region17: #{tpu_custom_call.1} parent=1 // pred_fallthru
      _
    // Predicated region
    $region18: #{tpu_custom_call.1} parent=1 // pred_check
      _
    $region19: #{tpu_custom_call.1} parent=1 // pred_check_branch
      %26 = sbr.rel (0) target = $region21
    $region20: #{tpu_custom_call.1} parent=1 // pred_region
      _
    $region21: #{tpu_custom_call.1} parent=1 // pred_fallthru
      _
    // Predicated region
    $region22: #{tpu_custom_call.1} parent=1 // pred_check
      _
    $region23: #{tpu_custom_call.1} parent=1 // pred_check_branch
      %28 = sbr.rel (0) target = $region25
    $region24: #{tpu_custom_call.1} parent=1 // pred_region
      _
    $region25: #{tpu_custom_call.1} parent=1 // pred_fallthru
      _
    // Predicated region
    $region26: #{tpu_custom_call.1} parent=1 // pred_check
      _
    $region27: #{tpu_custom_call.1} parent=1 // pred_check_branch
      %30 = sbr.rel (0) target = $region29
    $region28: #{tpu_custom_call.1} parent=1 // pred_region
      _
    $region29: #{tpu_custom_call.1} parent=1 // pred_fallthru
      _
    // Predicated region
    $region30: #{tpu_custom_call.1} parent=1 // pred_check
      _
    $region31: #{tpu_custom_call.1} parent=1 // pred_check_branch
      %32 = sbr.rel (0) target = $region33
    $region32: #{tpu_custom_call.1} parent=1 // pred_region
      _
    $region33: #{tpu_custom_call.1} parent=1 // pred_fallthru
      _
    %v33 = vld [vmem:[%s2] sm:$0xff]
    %v34 = vld [vmem:[%s2 + $0x8] sm:$0xff]
    %v35 = vld [vmem:[%s1] sm:$0xff]
    %v36 = vld [vmem:[%s1 + $0x8] sm:$0xff]
    %v37 = vld [vmem:[%s1 + $0x10] sm:$0xff]
    %v38 = vld [vmem:[%s1 + $0x18] sm:$0xff]
    %v39 = vld [vmem:[%s1 + $0x20] sm:$0xff]
    %v40 = vld [vmem:[%s1 + $0x28] sm:$0xff]
    %v41 = vld [vmem:[%s1 + $0x30] sm:$0xff]
    %v42 = vld [vmem:[%s1 + $0x38] sm:$0xff]
    %vm43 = vcmask 261120
    %v45 = vsel %vm43, %v33, 0
    %v48 = vsel %vm43, %v34, 0
    %v51 = vsel %vm43, %v35, 0
    %v54 = vsel %vm43, %v36, 0
    %v57 = vsel %vm43, %v37, 0
    %v60 = vsel %vm43, %v38, 0
    %v63 = vsel %vm43, %v39, 0
    %v66 = vsel %vm43, %v40, 0
    %v69 = vsel %vm43, %v41, 0
    %v72 = vsel %vm43, %v42, 0
    %74 = vmatprep.subr.mxu0 0.0
    %75 = vmatpush1.xpose.msra.mxu0 0.0
    %76 = vmatprep.subr.mxu0 0.0
    %77 = vmatpush1.xpose.msra.mxu0 0.0
    %78 = vmatprep.subr.mxu0 0.0
    %79 = vmatpush1.xpose.msra.mxu0 0.0
    %80 = vmatprep.subr.mxu0 0.0
    %81 = vmatpush1.xpose.msra.mxu0 0.0
    %82 = vmatprep.subr.mxu0 0.0
    %83 = vmatpush1.xpose.msra.mxu0 0.0
    %84 = vmatprep.subr.mxu0 0.0
    %85 = vmatpush1.xpose.msra.mxu0 0.0
    %86 = vmatprep.subr.mxu0 0.0
    %87 = vmatpush1.xpose.msra.mxu0 0.0
    %88 = vmatprep.subr.mxu0 0.0
    %89 = vmatpush1.xpose.msra.mxu0 0.0
    %90 = vmatprep.subr.mxu0 0.0
    %91 = vmatpush1.xpose.msra.mxu0 %v72
    %92 = vmatprep.subr.mxu0 0.0
    %93 = vmatpush1.xpose.msra.mxu0 %v69
    %94 = vmatprep.subr.mxu0 0.0
    %95 = vmatpush1.xpose.msra.mxu0 %v66
    %96 = vmatprep.subr.mxu0 0.0
    %97 = vmatpush1.xpose.msra.mxu0 %v63
    %98 = vmatprep.subr.mxu0 0.0
    %99 = vmatpush1.xpose.msra.mxu0 %v60
    %100 = vmatprep.subr.mxu0 0.0
    %101 = vmatpush1.xpose.msra.mxu0 %v57
    %102 = vmatprep.subr.mxu0 0.0
    %103 = vmatpush1.xpose.msra.mxu0 %v54
    %104 = vmatprep.subr.mxu0 0.0
    %105 = vmatpush1.xpose.msra.mxu0 %v51
    %106 = vmatprep.subr.mxu0 0.0
    %107 = vmatpush2.xpose.msra.mxu0 0.0
    %108 = vmatprep.subr.mxu0 0.0
    %109 = vmatpush2.xpose.msra.mxu0 0.0
    %110 = vmatprep.subr.mxu0 0.0
    %111 = vmatpush2.xpose.msra.mxu0 0.0
    %112 = vmatprep.subr.mxu0 0.0
    %113 = vmatpush2.xpose.msra.mxu0 0.0
    %114 = vmatprep.subr.mxu0 0.0
    %115 = vmatpush2.xpose.msra.mxu0 0.0
    %116 = vmatprep.subr.mxu0 0.0
    %117 = vmatpush2.xpose.msra.mxu0 0.0
    %118 = vmatprep.subr.mxu0 0.0
    %119 = vmatpush2.xpose.msra.mxu0 0.0
    %120 = vmatprep.subr.mxu0 0.0
    %121 = vmatpush2.xpose.msra.mxu0 0.0
    %122 = vmatprep.subr.mxu0 0.0
    %123 = vmatpush2.xpose.msra.mxu0 0.0
    %124 = vmatprep.subr.mxu0 0.0
    %125 = vmatpush2.xpose.msra.mxu0 0.0
    %126 = vmatprep.subr.mxu0 0.0
    %127 = vmatpush2.xpose.msra.mxu0 0.0
    %128 = vmatprep.subr.mxu0 0.0
    %129 = vmatpush2.xpose.msra.mxu0 0.0
    %130 = vmatprep.subr.mxu0 0.0
    %131 = vmatpush2.xpose.msra.mxu0 0.0
    %132 = vmatprep.subr.mxu0 0.0
    %133 = vmatpush2.xpose.msra.mxu0 0.0
    %134 = vmatprep.subr.mxu0 0.0
    %135 = vmatpush2.xpose.msra.mxu0 0.0
    %136 = vmatprep.subr.mxu0 0.0
    %137 = vmatpush2.xpose.msra.mxu0 0.0
    %138 = vmatprep.mubr.f32.mxu0 0.0
    %139 = vmatmul.mubr.f32.gmra.mxu0 %v45
    %v140 = vpop.f32.mrf.mxu0
    %v141 = vadd.f32 0.0, %v140
    %v142 = vpop.f32.mrf.mxu0
    %143 = vmatprep.mubr.f32.mxu0 0.0
    %144 = vmatmul.mubr.f32.gmra.mxu0 %v48
    %v145 = vpop.f32.mrf.mxu0
    %v146 = vadd.f32 0.0, %v145
    %v147 = vpop.f32.mrf.mxu0
    %148 = vdwg.mxu0
    %v149 = vld [vmem:[%s0] sm:$0xff]
    %v150 = vld [vmem:[%s0 + $0x8] sm:$0xff]
    %v151 = vld [vmem:[%s0 + $0x10] sm:$0xff]
    %v152 = vld [vmem:[%s0 + $0x18] sm:$0xff]
    %v153 = vld [vmem:[%s0 + $0x20] sm:$0xff]
    %v154 = vld [vmem:[%s0 + $0x28] sm:$0xff]
    %v155 = vld [vmem:[%s0 + $0x30] sm:$0xff]
    %v156 = vld [vmem:[%s0 + $0x38] sm:$0xff]
    %v157 = vld [vmem:[%s3] sm:$0xff]
    %v158 = vld [vmem:[%s3 + $0x8] sm:$0xff]
    %160 = vset.pattern.permute.xlu0 0
    %161 = vperm.xlu0 %160, %v157
    %v162 = vpop.permute.xlu0 %161
    %165 = vset.pattern.permute.xlu0 0
    %166 = vperm.xlu0 %165, %v158
    %v167 = vpop.permute.xlu0 %166
    %vm169 = vcmask 523264
    %v171 = vsel %vm169, %v141, 0
    %v174 = vsel %vm169, %v146, 0
    %v177 = vsel %vm169, %v149, 0
    %v180 = vsel %vm169, %v150, 0
    %v183 = vsel %vm169, %v151, 0
    %v186 = vsel %vm169, %v152, 0
    %v189 = vsel %vm169, %v153, 0
    %v192 = vsel %vm169, %v154, 0
    %v195 = vsel %vm169, %v155, 0
    %v198 = vsel %vm169, %v156, 0
    %200 = vmatprep.subr.mxu0 0.0
    %201 = vmatpush1.xpose.msra.mxu0 0.0
    %202 = vmatprep.subr.mxu0 0.0
    %203 = vmatpush1.xpose.msra.mxu0 0.0
    %204 = vmatprep.subr.mxu0 0.0
    %205 = vmatpush1.xpose.msra.mxu0 0.0
    %206 = vmatprep.subr.mxu0 0.0
    %207 = vmatpush1.xpose.msra.mxu0 0.0
    %208 = vmatprep.subr.mxu0 0.0
    %209 = vmatpush1.xpose.msra.mxu0 0.0
    %210 = vmatprep.subr.mxu0 0.0
    %211 = vmatpush1.xpose.msra.mxu0 0.0
    %212 = vmatprep.subr.mxu0 0.0
    %213 = vmatpush1.xpose.msra.mxu0 0.0
    %214 = vmatprep.subr.mxu0 0.0
    %215 = vmatpush1.xpose.msra.mxu0 0.0
    %216 = vmatprep.subr.mxu0 0.0
    %217 = vmatpush1.xpose.msra.mxu0 %v198
    %218 = vmatprep.subr.mxu0 0.0
    %219 = vmatpush1.xpose.msra.mxu0 %v195
    %220 = vmatprep.subr.mxu0 0.0
    %221 = vmatpush1.xpose.msra.mxu0 %v192
    %222 = vmatprep.subr.mxu0 0.0
    %223 = vmatpush1.xpose.msra.mxu0 %v189
    %224 = vmatprep.subr.mxu0 0.0
    %225 = vmatpush1.xpose.msra.mxu0 %v186
    %226 = vmatprep.subr.mxu0 0.0
    %227 = vmatpush1.xpose.msra.mxu0 %v183
    %228 = vmatprep.subr.mxu0 0.0
    %229 = vmatpush1.xpose.msra.mxu0 %v180
    %230 = vmatprep.subr.mxu0 0.0
    %231 = vmatpush1.xpose.msra.mxu0 %v177
    %232 = vmatprep.subr.mxu0 0.0
    %233 = vmatpush2.xpose.msra.mxu0 0.0
    %234 = vmatprep.subr.mxu0 0.0
    %235 = vmatpush2.xpose.msra.mxu0 0.0
    %236 = vmatprep.subr.mxu0 0.0
    %237 = vmatpush2.xpose.msra.mxu0 0.0
    %238 = vmatprep.subr.mxu0 0.0
    %239 = vmatpush2.xpose.msra.mxu0 0.0
    %240 = vmatprep.subr.mxu0 0.0
    %241 = vmatpush2.xpose.msra.mxu0 0.0
    %242 = vmatprep.subr.mxu0 0.0
    %243 = vmatpush2.xpose.msra.mxu0 0.0
    %244 = vmatprep.subr.mxu0 0.0
    %245 = vmatpush2.xpose.msra.mxu0 0.0
    %246 = vmatprep.subr.mxu0 0.0
    %247 = vmatpush2.xpose.msra.mxu0 0.0
    %248 = vmatprep.subr.mxu0 0.0
    %249 = vmatpush2.xpose.msra.mxu0 0.0
    %250 = vmatprep.subr.mxu0 0.0
    %251 = vmatpush2.xpose.msra.mxu0 0.0
    %252 = vmatprep.subr.mxu0 0.0
    %253 = vmatpush2.xpose.msra.mxu0 0.0
    %254 = vmatprep.subr.mxu0 0.0
    %255 = vmatpush2.xpose.msra.mxu0 0.0
    %256 = vmatprep.subr.mxu0 0.0
    %257 = vmatpush2.xpose.msra.mxu0 0.0
    %258 = vmatprep.subr.mxu0 0.0
    %259 = vmatpush2.xpose.msra.mxu0 0.0
    %260 = vmatprep.subr.mxu0 0.0
    %261 = vmatpush2.xpose.msra.mxu0 0.0
    %262 = vmatprep.subr.mxu0 0.0
    %263 = vmatpush2.xpose.msra.mxu0 0.0
    %264 = vmatprep.mubr.f32.mxu0 0.0
    %265 = vmatmul.mubr.f32.gmra.mxu0 %v171
    %v266 = vpop.f32.mrf.mxu0
    %v267 = vadd.f32 %v162, %v266
    %v268 = vpop.f32.mrf.mxu0
    %269 = vmatprep.mubr.f32.mxu0 0.0
    %270 = vmatmul.mubr.f32.gmra.mxu0 %v174
    %v271 = vpop.f32.mrf.mxu0
    %v272 = vadd.f32 %v167, %v271
    %v273 = vpop.f32.mrf.mxu0
    %274 = vdwg.mxu0
    %v275 = vld [vmem:[%s4] sm:$0x3]
    %v276 = vld [vmem:[%s5] sm:$0x3]
    %v277 = vlaneseq
    %v278 = vshrl.u32 %v277, 7
    %v279 = vadd.s32 %v278, 8
    %v280 = vadd.s32 %v278, 16
    %v281 = vadd.s32 %v278, 24
    %v282 = vadd.s32 %v278, 32
    %v283 = vadd.s32 %v278, 40
    %v284 = vadd.s32 %v278, 48
    %v285 = vadd.s32 %v278, 56
    %v286 = vlaneseq
    %v287 = vshrl.u32 %v286, 7
    %v288 = vsub.s32 0, %v287
    %v289 = vrot.slane %v275, %v288
    %v290 = vlaneseq
    %v291 = vshrl.u32 %v290, 7
    %v292 = vsub.s32 1, %v291
    %v293 = vrot.slane %v275, %v292
    %vm294 = vcmp.eq.s32.totalorder %v278, %v289
    %vm295 = vcmp.eq.s32.totalorder %v278, %v293
    %vm296 = vcmp.eq.s32.totalorder %v279, %v289
    %vm297 = vcmp.eq.s32.totalorder %v279, %v293
    %vm298 = vcmp.eq.s32.totalorder %v280, %v289
    %vm299 = vcmp.eq.s32.totalorder %v280, %v293
    %vm300 = vcmp.eq.s32.totalorder %v281, %v289
    %vm301 = vcmp.eq.s32.totalorder %v281, %v293
    %vm302 = vcmp.eq.s32.totalorder %v282, %v289
    %vm303 = vcmp.eq.s32.totalorder %v282, %v293
    %vm304 = vcmp.eq.s32.totalorder %v283, %v289
    %vm305 = vcmp.eq.s32.totalorder %v283, %v293
    %vm306 = vcmp.eq.s32.totalorder %v284, %v289
    %vm307 = vcmp.eq.s32.totalorder %v284, %v293
    %vm308 = vcmp.eq.s32.totalorder %v285, %v289
    %vm309 = vcmp.eq.s32.totalorder %v285, %v293
    %v310 = vsel %vm294, 1, 0
    %v311 = vsel %vm295, 1, 0
    %v312 = vsel %vm296, 1, 0
    %v313 = vsel %vm297, 1, 0
    %v314 = vsel %vm298, 1, 0
    %v315 = vsel %vm299, 1, 0
    %v316 = vsel %vm300, 1, 0
    %v317 = vsel %vm301, 1, 0
    %v318 = vsel %vm302, 1, 0
    %v319 = vsel %vm303, 1, 0
    %v320 = vsel %vm304, 1, 0
    %v321 = vsel %vm305, 1, 0
    %v322 = vsel %vm306, 1, 0
    %v323 = vsel %vm307, 1, 0
    %v324 = vsel %vm308, 1, 0
    %v325 = vsel %vm309, 1, 0
    %v326 = vcvt.s32.f32 %v310
    %v327 = vcvt.s32.f32 %v311
    %v328 = vcvt.s32.f32 %v312
    %v329 = vcvt.s32.f32 %v313
    %v330 = vcvt.s32.f32 %v314
    %v331 = vcvt.s32.f32 %v315
    %v332 = vcvt.s32.f32 %v316
    %v333 = vcvt.s32.f32 %v317
    %v334 = vcvt.s32.f32 %v318
    %v335 = vcvt.s32.f32 %v319
    %v336 = vcvt.s32.f32 %v320
    %v337 = vcvt.s32.f32 %v321
    %v338 = vcvt.s32.f32 %v322
    %v339 = vcvt.s32.f32 %v323
    %v340 = vcvt.s32.f32 %v324
    %v341 = vcvt.s32.f32 %v325
    %v342 = vlaneseq
    %v343 = vshrl.u32 %v342, 7
    %v344 = vsub.s32 0, %v343
    %v345 = vrot.slane %v276, %v344
    %v346 = vlaneseq
    %v347 = vshrl.u32 %v346, 7
    %v348 = vsub.s32 1, %v347
    %v349 = vrot.slane %v276, %v348
    %vm350 = vcmp.eq.s32.totalorder %v278, %v345
    %vm351 = vcmp.eq.s32.totalorder %v278, %v349
    %vm352 = vcmp.eq.s32.totalorder %v279, %v345
    %vm353 = vcmp.eq.s32.totalorder %v279, %v349
    %vm354 = vcmp.eq.s32.totalorder %v280, %v345
    %vm355 = vcmp.eq.s32.totalorder %v280, %v349
    %vm356 = vcmp.eq.s32.totalorder %v281, %v345
    %vm357 = vcmp.eq.s32.totalorder %v281, %v349
    %vm358 = vcmp.eq.s32.totalorder %v282, %v345
    %vm359 = vcmp.eq.s32.totalorder %v282, %v349
    %vm360 = vcmp.eq.s32.totalorder %v283, %v345
    %vm361 = vcmp.eq.s32.totalorder %v283, %v349
    %vm362 = vcmp.eq.s32.totalorder %v284, %v345
    %vm363 = vcmp.eq.s32.totalorder %v284, %v349
    %vm364 = vcmp.eq.s32.totalorder %v285, %v345
    %vm365 = vcmp.eq.s32.totalorder %v285, %v349
    %v366 = vsel %vm350, 1, 0
    %v367 = vsel %vm351, 1, 0
    %v368 = vsel %vm352, 1, 0
    %v369 = vsel %vm353, 1, 0
    %v370 = vsel %vm354, 1, 0
    %v371 = vsel %vm355, 1, 0
    %v372 = vsel %vm356, 1, 0
    %v373 = vsel %vm357, 1, 0
    %v374 = vsel %vm358, 1, 0
    %v375 = vsel %vm359, 1, 0
    %v376 = vsel %vm360, 1, 0
    %v377 = vsel %vm361, 1, 0
    %v378 = vsel %vm362, 1, 0
    %v379 = vsel %vm363, 1, 0
    %v380 = vsel %vm364, 1, 0
    %v381 = vsel %vm365, 1, 0
    %v382 = vcvt.s32.f32 %v366
    %v383 = vcvt.s32.f32 %v367
    %v384 = vcvt.s32.f32 %v368
    %v385 = vcvt.s32.f32 %v369
    %v386 = vcvt.s32.f32 %v370
    %v387 = vcvt.s32.f32 %v371
    %v388 = vcvt.s32.f32 %v372
    %v389 = vcvt.s32.f32 %v373
    %v390 = vcvt.s32.f32 %v374
    %v391 = vcvt.s32.f32 %v375
    %v392 = vcvt.s32.f32 %v376
    %v393 = vcvt.s32.f32 %v377
    %v394 = vcvt.s32.f32 %v378
    %v395 = vcvt.s32.f32 %v379
    %v396 = vcvt.s32.f32 %v380
    %v397 = vcvt.s32.f32 %v381
    %v399 = vsel %vm169, %v267, 0
    %v402 = vsel %vm169, %v272, 0
    %404 = vmatprep.subr.mxu0 0.0
    %405 = vmatpush1.msra.mxu0 0.0
    %406 = vmatprep.subr.mxu0 0.0
    %407 = vmatpush1.msra.mxu0 0.0
    %408 = vmatprep.subr.mxu0 0.0
    %409 = vmatpush1.msra.mxu0 0.0
    %410 = vmatprep.subr.mxu0 0.0
    %411 = vmatpush1.msra.mxu0 0.0
    %412 = vmatprep.subr.mxu0 0.0
    %413 = vmatpush1.msra.mxu0 0.0
    %414 = vmatprep.subr.mxu0 0.0
    %415 = vmatpush1.msra.mxu0 0.0
    %416 = vmatprep.subr.mxu0 0.0
    %417 = vmatpush1.msra.mxu0 0.0
    %418 = vmatprep.subr.mxu0 0.0
    %419 = vmatpush1.msra.mxu0 0.0
    %420 = vmatprep.subr.mxu0 %v341
    %421 = vmatpush1.msra.mxu0 %v340
    %422 = vmatprep.subr.mxu0 %v339
    %423 = vmatpush1.msra.mxu0 %v338
    %424 = vmatprep.subr.mxu0 %v337
    %425 = vmatpush1.msra.mxu0 %v336
    %426 = vmatprep.subr.mxu0 %v335
    %427 = vmatpush1.msra.mxu0 %v334
    %428 = vmatprep.subr.mxu0 %v333
    %429 = vmatpush1.msra.mxu0 %v332
    %430 = vmatprep.subr.mxu0 %v331
    %431 = vmatpush1.msra.mxu0 %v330
    %432 = vmatprep.subr.mxu0 %v329
    %433 = vmatpush1.msra.mxu0 %v328
    %434 = vmatprep.subr.mxu0 %v327
    %435 = vmatpush1.msra.mxu0 %v326
    %436 = vmatprep.subr.mxu0 0.0
    %437 = vmatpush2.msra.mxu0 0.0
    %438 = vmatprep.subr.mxu0 0.0
    %439 = vmatpush2.msra.mxu0 0.0
    %440 = vmatprep.subr.mxu0 0.0
    %441 = vmatpush2.msra.mxu0 0.0
    %442 = vmatprep.subr.mxu0 0.0
    %443 = vmatpush2.msra.mxu0 0.0
    %444 = vmatprep.subr.mxu0 0.0
    %445 = vmatpush2.msra.mxu0 0.0
    %446 = vmatprep.subr.mxu0 0.0
    %447 = vmatpush2.msra.mxu0 0.0
    %448 = vmatprep.subr.mxu0 0.0
    %449 = vmatpush2.msra.mxu0 0.0
    %450 = vmatprep.subr.mxu0 0.0
    %451 = vmatpush2.msra.mxu0 0.0
    %452 = vmatprep.subr.mxu0 0.0
    %453 = vmatpush2.msra.mxu0 0.0
    %454 = vmatprep.subr.mxu0 0.0
    %455 = vmatpush2.msra.mxu0 0.0
    %456 = vmatprep.subr.mxu0 0.0
    %457 = vmatpush2.msra.mxu0 0.0
    %458 = vmatprep.subr.mxu0 0.0
    %459 = vmatpush2.msra.mxu0 0.0
    %460 = vmatprep.subr.mxu0 0.0
    %461 = vmatpush2.msra.mxu0 0.0
    %462 = vmatprep.subr.mxu0 0.0
    %463 = vmatpush2.msra.mxu0 0.0
    %464 = vmatprep.subr.mxu0 0.0
    %465 = vmatpush2.msra.mxu0 0.0
    %466 = vmatprep.subr.mxu0 0.0
    %467 = vmatpush2.msra.mxu0 0.0
    %468 = vmatprep.mubr.f32.mxu0 0.0
    %469 = vmatmul.mubr.f32.gmra.mxu0 %v399
    %v470 = vpop.f32.mrf.mxu0
    %v471 = vadd.f32 0.0, %v470
    %v472 = vpop.f32.mrf.mxu0
    %v473 = vadd.f32 0.0, %v472
    %474 = vmatprep.mubr.f32.mxu0 0.0
    %475 = vmatmul.mubr.f32.gmra.mxu0 %v402
    %v476 = vpop.f32.mrf.mxu0
    %v477 = vadd.f32 0.0, %v476
    %v478 = vpop.f32.mrf.mxu0
    %v479 = vadd.f32 0.0, %v478
    %480 = vdwg.mxu0
    %481 = vmatprep.subr.mxu0 0.0
    %482 = vmatpush1.msra.mxu0 0.0
    %483 = vmatprep.subr.mxu0 0.0
    %484 = vmatpush1.msra.mxu0 0.0
    %485 = vmatprep.subr.mxu0 0.0
    %486 = vmatpush1.msra.mxu0 0.0
    %487 = vmatprep.subr.mxu0 0.0
    %488 = vmatpush1.msra.mxu0 0.0
    %489 = vmatprep.subr.mxu0 0.0
    %490 = vmatpush1.msra.mxu0 0.0
    %491 = vmatprep.subr.mxu0 0.0
    %492 = vmatpush1.msra.mxu0 0.0
    %493 = vmatprep.subr.mxu0 0.0
    %494 = vmatpush1.msra.mxu0 0.0
    %495 = vmatprep.subr.mxu0 0.0
    %496 = vmatpush1.msra.mxu0 0.0
    %497 = vmatprep.subr.mxu0 %v397
    %498 = vmatpush1.msra.mxu0 %v396
    %499 = vmatprep.subr.mxu0 %v395
    %500 = vmatpush1.msra.mxu0 %v394
    %501 = vmatprep.subr.mxu0 %v393
    %502 = vmatpush1.msra.mxu0 %v392
    %503 = vmatprep.subr.mxu0 %v391
    %504 = vmatpush1.msra.mxu0 %v390
    %505 = vmatprep.subr.mxu0 %v389
    %506 = vmatpush1.msra.mxu0 %v388
    %507 = vmatprep.subr.mxu0 %v387
    %508 = vmatpush1.msra.mxu0 %v386
    %509 = vmatprep.subr.mxu0 %v385
    %510 = vmatpush1.msra.mxu0 %v384
    %511 = vmatprep.subr.mxu0 %v383
    %512 = vmatpush1.msra.mxu0 %v382
    %513 = vmatprep.subr.mxu0 0.0
    %514 = vmatpush2.msra.mxu0 0.0
    %515 = vmatprep.subr.mxu0 0.0
    %516 = vmatpush2.msra.mxu0 0.0
    %517 = vmatprep.subr.mxu0 0.0
    %518 = vmatpush2.msra.mxu0 0.0
    %519 = vmatprep.subr.mxu0 0.0
    %520 = vmatpush2.msra.mxu0 0.0
    %521 = vmatprep.subr.mxu0 0.0
    %522 = vmatpush2.msra.mxu0 0.0
    %523 = vmatprep.subr.mxu0 0.0
    %524 = vmatpush2.msra.mxu0 0.0
    %525 = vmatprep.subr.mxu0 0.0
    %526 = vmatpush2.msra.mxu0 0.0
    %527 = vmatprep.subr.mxu0 0.0
    %528 = vmatpush2.msra.mxu0 0.0
    %529 = vmatprep.subr.mxu0 0.0
    %530 = vmatpush2.msra.mxu0 0.0
    %531 = vmatprep.subr.mxu0 0.0
    %532 = vmatpush2.msra.mxu0 0.0
    %533 = vmatprep.subr.mxu0 0.0
    %534 = vmatpush2.msra.mxu0 0.0
    %535 = vmatprep.subr.mxu0 0.0
    %536 = vmatpush2.msra.mxu0 0.0
    %537 = vmatprep.subr.mxu0 0.0
    %538 = vmatpush2.msra.mxu0 0.0
    %539 = vmatprep.subr.mxu0 0.0
    %540 = vmatpush2.msra.mxu0 0.0
    %541 = vmatprep.subr.mxu0 0.0
    %542 = vmatpush2.msra.mxu0 0.0
    %543 = vmatprep.subr.mxu0 0.0
    %544 = vmatpush2.msra.mxu0 0.0
    %545 = vmatprep.mubr.f32.mxu0 0.0
    %546 = vmatmul.mubr.f32.gmra.mxu0 %v399
    %v547 = vpop.f32.mrf.mxu0
    %v548 = vadd.f32 0.0, %v547
    %v549 = vpop.f32.mrf.mxu0
    %v550 = vadd.f32 0.0, %v549
    %551 = vmatprep.mubr.f32.mxu0 0.0
    %552 = vmatmul.mubr.f32.gmra.mxu0 %v402
    %v553 = vpop.f32.mrf.mxu0
    %v554 = vadd.f32 0.0, %v553
    %v555 = vpop.f32.mrf.mxu0
    %v556 = vadd.f32 0.0, %v555
    %557 = vdwg.mxu0
    %v558 = vmul.f32 %v471, %v548
    %v559 = vmul.f32 %v473, %v550
    %v560 = vmul.f32 %v477, %v554
    %v561 = vmul.f32 %v479, %v556
    %v562 = vadd.f32 %v558, %v560
    %v563 = vrot.slane %v562, 4
    %v564 = vadd.f32 %v562, %v563
    %v565 = vrot.slane %v564, 2
    %v566 = vadd.f32 %v564, %v565
    %v567 = vrot.slane %v566, 1
    %v568 = vadd.f32 %v566, %v567
    %v569 = vadd.f32 %v559, %v561
    %v570 = vrot.slane %v569, 4
    %v571 = vadd.f32 %v569, %v570
    %v572 = vrot.slane %v571, 2
    %v573 = vadd.f32 %v571, %v572
    %v574 = vrot.slane %v573, 1
    %v575 = vadd.f32 %v573, %v574
    %v578 = vcombine.low %v568, %v575
    %v580 = vunpack.c.l.s4 1966171168
    %v581 = vunpack.c.0.s8 %v580
    %v582 = vlaneseq
    %v583 = vshrl.u32 %v582, 7
    %v584 = vsub.s32 %v581, %v583
    %v585 = vrot.slane %v578, %v584
    %v587 = vunpack.c.l.s4 1966171168
    %v588 = vunpack.c.0.s8 %v587
    %v589 = vlaneseq
    %v590 = vshrl.u32 %v589, 7
    %v591 = vsub.s32 %v588, %v590
    %v592 = vrot.slane %v585, %v591
    %v594 = vlaneseq
    %vm595 = vcmp.ge.s32.totalorder %v594, 0
    %vm596 = vcmp.lt.s32.totalorder %v594, 256
    %vm597 = vmand %vm595, %vm596
    %598 = vst.msk [vmem:[#allocation2] sm:$0x3] %vm597, %v592
    %v599 = vld [vmem:[%s6] sm:$0x3]
    %v600 = vld [vmem:[%s7] sm:$0x3]
    %v601 = vlaneseq
    %v602 = vshrl.u32 %v601, 7
    %v603 = vsub.s32 0, %v602
    %v604 = vrot.slane %v599, %v603
    %v605 = vlaneseq
    %v606 = vshrl.u32 %v605, 7
    %v607 = vsub.s32 1, %v606
    %v608 = vrot.slane %v599, %v607
    %vm609 = vcmp.eq.s32.totalorder %v278, %v604
    %vm610 = vcmp.eq.s32.totalorder %v278, %v608
    %vm611 = vcmp.eq.s32.totalorder %v279, %v604
    %vm612 = vcmp.eq.s32.totalorder %v279, %v608
    %vm613 = vcmp.eq.s32.totalorder %v280, %v604
    %vm614 = vcmp.eq.s32.totalorder %v280, %v608
    %vm615 = vcmp.eq.s32.totalorder %v281, %v604
    %vm616 = vcmp.eq.s32.totalorder %v281, %v608
    %vm617 = vcmp.eq.s32.totalorder %v282, %v604
    %vm618 = vcmp.eq.s32.totalorder %v282, %v608
    %vm619 = vcmp.eq.s32.totalorder %v283, %v604
    %vm620 = vcmp.eq.s32.totalorder %v283, %v608
    %vm621 = vcmp.eq.s32.totalorder %v284, %v604
    %vm622 = vcmp.eq.s32.totalorder %v284, %v608
    %vm623 = vcmp.eq.s32.totalorder %v285, %v604
    %vm624 = vcmp.eq.s32.totalorder %v285, %v608
    %v625 = vsel %vm609, 1, 0
    %v626 = vsel %vm610, 1, 0
    %v627 = vsel %vm611, 1, 0
    %v628 = vsel %vm612, 1, 0
    %v629 = vsel %vm613, 1, 0
    %v630 = vsel %vm614, 1, 0
    %v631 = vsel %vm615, 1, 0
    %v632 = vsel %vm616, 1, 0
    %v633 = vsel %vm617, 1, 0
    %v634 = vsel %vm618, 1, 0
    %v635 = vsel %vm619, 1, 0
    %v636 = vsel %vm620, 1, 0
    %v637 = vsel %vm621, 1, 0
    %v638 = vsel %vm622, 1, 0
    %v639 = vsel %vm623, 1, 0
    %v640 = vsel %vm624, 1, 0
    %v641 = vcvt.s32.f32 %v625
    %v642 = vcvt.s32.f32 %v626
    %v643 = vcvt.s32.f32 %v627
    %v644 = vcvt.s32.f32 %v628
    %v645 = vcvt.s32.f32 %v629
    %v646 = vcvt.s32.f32 %v630
    %v647 = vcvt.s32.f32 %v631
    %v648 = vcvt.s32.f32 %v632
    %v649 = vcvt.s32.f32 %v633
    %v650 = vcvt.s32.f32 %v634
    %v651 = vcvt.s32.f32 %v635
    %v652 = vcvt.s32.f32 %v636
    %v653 = vcvt.s32.f32 %v637
    %v654 = vcvt.s32.f32 %v638
    %v655 = vcvt.s32.f32 %v639
    %v656 = vcvt.s32.f32 %v640
    %v657 = vlaneseq
    %v658 = vshrl.u32 %v657, 7
    %v659 = vsub.s32 0, %v658
    %v660 = vrot.slane %v600, %v659
    %v661 = vlaneseq
    %v662 = vshrl.u32 %v661, 7
    %v663 = vsub.s32 1, %v662
    %v664 = vrot.slane %v600, %v663
    %vm665 = vcmp.eq.s32.totalorder %v278, %v660
    %vm666 = vcmp.eq.s32.totalorder %v278, %v664
    %vm667 = vcmp.eq.s32.totalorder %v279, %v660
    %vm668 = vcmp.eq.s32.totalorder %v279, %v664
    %vm669 = vcmp.eq.s32.totalorder %v280, %v660
    %vm670 = vcmp.eq.s32.totalorder %v280, %v664
    %vm671 = vcmp.eq.s32.totalorder %v281, %v660
    %vm672 = vcmp.eq.s32.totalorder %v281, %v664
    %vm673 = vcmp.eq.s32.totalorder %v282, %v660
    %vm674 = vcmp.eq.s32.totalorder %v282, %v664
    %vm675 = vcmp.eq.s32.totalorder %v283, %v660
    %vm676 = vcmp.eq.s32.totalorder %v283, %v664
    %vm677 = vcmp.eq.s32.totalorder %v284, %v660
    %vm678 = vcmp.eq.s32.totalorder %v284, %v664
    %vm679 = vcmp.eq.s32.totalorder %v285, %v660
    %vm680 = vcmp.eq.s32.totalorder %v285, %v664
    %v681 = vsel %vm665, 1, 0
    %v682 = vsel %vm666, 1, 0
    %v683 = vsel %vm667, 1, 0
    %v684 = vsel %vm668, 1, 0
    %v685 = vsel %vm669, 1, 0
    %v686 = vsel %vm670, 1, 0
    %v687 = vsel %vm671, 1, 0
    %v688 = vsel %vm672, 1, 0
    %v689 = vsel %vm673, 1, 0
    %v690 = vsel %vm674, 1, 0
    %v691 = vsel %vm675, 1, 0
    %v692 = vsel %vm676, 1, 0
    %v693 = vsel %vm677, 1, 0
    %v694 = vsel %vm678, 1, 0
    %v695 = vsel %vm679, 1, 0
    %v696 = vsel %vm680, 1, 0
    %v697 = vcvt.s32.f32 %v681
    %v698 = vcvt.s32.f32 %v682
    %v699 = vcvt.s32.f32 %v683
    %v700 = vcvt.s32.f32 %v684
    %v701 = vcvt.s32.f32 %v685
    %v702 = vcvt.s32.f32 %v686
    %v703 = vcvt.s32.f32 %v687
    %v704 = vcvt.s32.f32 %v688
    %v705 = vcvt.s32.f32 %v689
    %v706 = vcvt.s32.f32 %v690
    %v707 = vcvt.s32.f32 %v691
    %v708 = vcvt.s32.f32 %v692
    %v709 = vcvt.s32.f32 %v693
    %v710 = vcvt.s32.f32 %v694
    %v711 = vcvt.s32.f32 %v695
    %v712 = vcvt.s32.f32 %v696
    %713 = vmatprep.subr.mxu0 0.0
    %714 = vmatpush1.msra.mxu0 0.0
    %715 = vmatprep.subr.mxu0 0.0
    %716 = vmatpush1.msra.mxu0 0.0
    %717 = vmatprep.subr.mxu0 0.0
    %718 = vmatpush1.msra.mxu0 0.0
    %719 = vmatprep.subr.mxu0 0.0
    %720 = vmatpush1.msra.mxu0 0.0
    %721 = vmatprep.subr.mxu0 0.0
    %722 = vmatpush1.msra.mxu0 0.0
    %723 = vmatprep.subr.mxu0 0.0
    %724 = vmatpush1.msra.mxu0 0.0
    %725 = vmatprep.subr.mxu0 0.0
    %726 = vmatpush1.msra.mxu0 0.0
    %727 = vmatprep.subr.mxu0 0.0
    %728 = vmatpush1.msra.mxu0 0.0
    %729 = vmatprep.subr.mxu0 %v656
    %730 = vmatpush1.msra.mxu0 %v655
    %731 = vmatprep.subr.mxu0 %v654
    %732 = vmatpush1.msra.mxu0 %v653
    %733 = vmatprep.subr.mxu0 %v652
    %734 = vmatpush1.msra.mxu0 %v651
    %735 = vmatprep.subr.mxu0 %v650
    %736 = vmatpush1.msra.mxu0 %v649
    %737 = vmatprep.subr.mxu0 %v648
    %738 = vmatpush1.msra.mxu0 %v647
    %739 = vmatprep.subr.mxu0 %v646
    %740 = vmatpush1.msra.mxu0 %v645
    %741 = vmatprep.subr.mxu0 %v644
    %742 = vmatpush1.msra.mxu0 %v643
    %743 = vmatprep.subr.mxu0 %v642
    %744 = vmatpush1.msra.mxu0 %v641
    %745 = vmatprep.subr.mxu0 0.0
    %746 = vmatpush2.msra.mxu0 0.0
    %747 = vmatprep.subr.mxu0 0.0
    %748 = vmatpush2.msra.mxu0 0.0
    %749 = vmatprep.subr.mxu0 0.0
    %750 = vmatpush2.msra.mxu0 0.0
    %751 = vmatprep.subr.mxu0 0.0
    %752 = vmatpush2.msra.mxu0 0.0
    %753 = vmatprep.subr.mxu0 0.0
    %754 = vmatpush2.msra.mxu0 0.0
    %755 = vmatprep.subr.mxu0 0.0
    %756 = vmatpush2.msra.mxu0 0.0
    %757 = vmatprep.subr.mxu0 0.0
    %758 = vmatpush2.msra.mxu0 0.0
    %759 = vmatprep.subr.mxu0 0.0
    %760 = vmatpush2.msra.mxu0 0.0
    %761 = vmatprep.subr.mxu0 0.0
    %762 = vmatpush2.msra.mxu0 0.0
    %763 = vmatprep.subr.mxu0 0.0
    %764 = vmatpush2.msra.mxu0 0.0
    %765 = vmatprep.subr.mxu0 0.0
    %766 = vmatpush2.msra.mxu0 0.0
    %767 = vmatprep.subr.mxu0 0.0
    %768 = vmatpush2.msra.mxu0 0.0
    %769 = vmatprep.subr.mxu0 0.0
    %770 = vmatpush2.msra.mxu0 0.0
    %771 = vmatprep.subr.mxu0 0.0
    %772 = vmatpush2.msra.mxu0 0.0
    %773 = vmatprep.subr.mxu0 0.0
    %774 = vmatpush2.msra.mxu0 0.0
    %775 = vmatprep.subr.mxu0 0.0
    %776 = vmatpush2.msra.mxu0 0.0
    %777 = vmatprep.mubr.f32.mxu0 0.0
    %778 = vmatmul.mubr.f32.gmra.mxu0 %v399
    %v779 = vpop.f32.mrf.mxu0
    %v780 = vadd.f32 0.0, %v779
    %v781 = vpop.f32.mrf.mxu0
    %v782 = vadd.f32 0.0, %v781
    %783 = vmatprep.mubr.f32.mxu0 0.0
    %784 = vmatmul.mubr.f32.gmra.mxu0 %v402
    %v785 = vpop.f32.mrf.mxu0
    %v786 = vadd.f32 0.0, %v785
    %v787 = vpop.f32.mrf.mxu0
    %v788 = vadd.f32 0.0, %v787
    %789 = vdwg.mxu0
    %790 = vmatprep.subr.mxu0 0.0
    %791 = vmatpush1.msra.mxu0 0.0
    %792 = vmatprep.subr.mxu0 0.0
    %793 = vmatpush1.msra.mxu0 0.0
    %794 = vmatprep.subr.mxu0 0.0
    %795 = vmatpush1.msra.mxu0 0.0
    %796 = vmatprep.subr.mxu0 0.0
    %797 = vmatpush1.msra.mxu0 0.0
    %798 = vmatprep.subr.mxu0 0.0
    %799 = vmatpush1.msra.mxu0 0.0
    %800 = vmatprep.subr.mxu0 0.0
    %801 = vmatpush1.msra.mxu0 0.0
    %802 = vmatprep.subr.mxu0 0.0
    %803 = vmatpush1.msra.mxu0 0.0
    %804 = vmatprep.subr.mxu0 0.0
    %805 = vmatpush1.msra.mxu0 0.0
    %806 = vmatprep.subr.mxu0 %v712
    %807 = vmatpush1.msra.mxu0 %v711
    %808 = vmatprep.subr.mxu0 %v710
    %809 = vmatpush1.msra.mxu0 %v709
    %810 = vmatprep.subr.mxu0 %v708
    %811 = vmatpush1.msra.mxu0 %v707
    %812 = vmatprep.subr.mxu0 %v706
    %813 = vmatpush1.msra.mxu0 %v705
    %814 = vmatprep.subr.mxu0 %v704
    %815 = vmatpush1.msra.mxu0 %v703
    %816 = vmatprep.subr.mxu0 %v702
    %817 = vmatpush1.msra.mxu0 %v701
    %818 = vmatprep.subr.mxu0 %v700
    %819 = vmatpush1.msra.mxu0 %v699
    %820 = vmatprep.subr.mxu0 %v698
    %821 = vmatpush1.msra.mxu0 %v697
    %822 = vmatprep.subr.mxu0 0.0
    %823 = vmatpush2.msra.mxu0 0.0
    %824 = vmatprep.subr.mxu0 0.0
    %825 = vmatpush2.msra.mxu0 0.0
    %826 = vmatprep.subr.mxu0 0.0
    %827 = vmatpush2.msra.mxu0 0.0
    %828 = vmatprep.subr.mxu0 0.0
    %829 = vmatpush2.msra.mxu0 0.0
    %830 = vmatprep.subr.mxu0 0.0
    %831 = vmatpush2.msra.mxu0 0.0
    %832 = vmatprep.subr.mxu0 0.0
    %833 = vmatpush2.msra.mxu0 0.0
    %834 = vmatprep.subr.mxu0 0.0
    %835 = vmatpush2.msra.mxu0 0.0
    %836 = vmatprep.subr.mxu0 0.0
    %837 = vmatpush2.msra.mxu0 0.0
    %838 = vmatprep.subr.mxu0 0.0
    %839 = vmatpush2.msra.mxu0 0.0
    %840 = vmatprep.subr.mxu0 0.0
    %841 = vmatpush2.msra.mxu0 0.0
    %842 = vmatprep.subr.mxu0 0.0
    %843 = vmatpush2.msra.mxu0 0.0
    %844 = vmatprep.subr.mxu0 0.0
    %845 = vmatpush2.msra.mxu0 0.0
    %846 = vmatprep.subr.mxu0 0.0
    %847 = vmatpush2.msra.mxu0 0.0
    %848 = vmatprep.subr.mxu0 0.0
    %849 = vmatpush2.msra.mxu0 0.0
    %850 = vmatprep.subr.mxu0 0.0
    %851 = vmatpush2.msra.mxu0 0.0
    %852 = vmatprep.subr.mxu0 0.0
    %853 = vmatpush2.msra.mxu0 0.0
    %854 = vmatprep.mubr.f32.mxu0 0.0
    %855 = vmatmul.mubr.f32.gmra.mxu0 %v399
    %v856 = vpop.f32.mrf.mxu0
    %v857 = vadd.f32 0.0, %v856
    %v858 = vpop.f32.mrf.mxu0
    %v859 = vadd.f32 0.0, %v858
    %860 = vmatprep.mubr.f32.mxu0 0.0
    %861 = vmatmul.mubr.f32.gmra.mxu0 %v402
    %v862 = vpop.f32.mrf.mxu0
    %v863 = vadd.f32 0.0, %v862
    %v864 = vpop.f32.mrf.mxu0
    %v865 = vadd.f32 0.0, %v864
    %866 = vdwg.mxu0
    %v867 = vmul.f32 %v780, %v857
    %v868 = vmul.f32 %v782, %v859
    %v869 = vmul.f32 %v786, %v863
    %v870 = vmul.f32 %v788, %v865
    %v871 = vadd.f32 %v867, %v869
    %v872 = vrot.slane %v871, 4
    %v873 = vadd.f32 %v871, %v872
    %v874 = vrot.slane %v873, 2
    %v875 = vadd.f32 %v873, %v874
    %v876 = vrot.slane %v875, 1
    %v877 = vadd.f32 %v875, %v876
    %v878 = vadd.f32 %v868, %v870
    %v879 = vrot.slane %v878, 4
    %v880 = vadd.f32 %v878, %v879
    %v881 = vrot.slane %v880, 2
    %v882 = vadd.f32 %v880, %v881
    %v883 = vrot.slane %v882, 1
    %v884 = vadd.f32 %v882, %v883
    %v887 = vcombine.low %v877, %v884
    %v889 = vunpack.c.l.s4 1966171168
    %v890 = vunpack.c.0.s8 %v889
    %v891 = vlaneseq
    %v892 = vshrl.u32 %v891, 7
    %v893 = vsub.s32 %v890, %v892
    %v894 = vrot.slane %v887, %v893
    %v896 = vunpack.c.l.s4 1966171168
    %v897 = vunpack.c.0.s8 %v896
    %v898 = vlaneseq
    %v899 = vshrl.u32 %v898, 7
    %v900 = vsub.s32 %v897, %v899
    %v901 = vrot.slane %v894, %v900
    %903 = vst.msk [vmem:[#allocation4] sm:$0x3] %vm597, %v901
    // Predicated region
    $region34: #{tpu_custom_call.1} parent=1 // pred_check
      _
    $region35: #{tpu_custom_call.1} parent=1 // pred_check_branch
      %905 = sbr.rel (0) target = $region37
    $region36: #{tpu_custom_call.1} parent=1 // pred_region
      %s907 = ssub.s32 32, 32
      %908 = vsyncadd [#allocation3], %s907
      %s910 = sshll.u32 [#allocation2], 4
      %s911 = int_to_ptr.vmem [resolvable:$true] %s910
      %913 = dma.vmem_to_hbm [thread:$0]  %s911, 32, %s8, [#allocation3]
    $region37: #{tpu_custom_call.1} parent=1 // pred_fallthru
      _
    // Predicated region
    $region38: #{tpu_custom_call.1} parent=1 // pred_check
      _
    $region39: #{tpu_custom_call.1} parent=1 // pred_check_branch
      %915 = sbr.rel (0) target = $region41
    $region40: #{tpu_custom_call.1} parent=1 // pred_region
      %s917 = ssub.s32 32, 32
      %918 = vsyncadd [#allocation5], %s917
      %s920 = sshll.u32 [#allocation4], 4
      %s921 = int_to_ptr.vmem [resolvable:$true] %s920
      %923 = dma.vmem_to_hbm [thread:$0]  %s921, 32, %s9, [#allocation5]
    $region41: #{tpu_custom_call.1} parent=1 // pred_fallthru
      _
    // Predicated region
    $region42: #{tpu_custom_call.1} parent=1 // pred_check
      _
    $region43: #{tpu_custom_call.1} parent=1 // pred_check_branch
      %925 = sbr.rel (0) target = $region45
    $region44: #{tpu_custom_call.1} parent=1 // pred_region
      %926 = dma.done [#allocation3], 32
    $region45: #{tpu_custom_call.1} parent=1 // pred_fallthru
      _
    // Predicated region
    $region46: #{tpu_custom_call.1} parent=1 // pred_check
      _
    $region47: #{tpu_custom_call.1} parent=1 // pred_check_branch
      %928 = sbr.rel (0) target = $region49
    $region48: #{tpu_custom_call.1} parent=1 // pred_region
      %929 = dma.done [#allocation5], 32
    $region49: #{tpu_custom_call.1} parent=1 // pred_fallthru
      _
    %930 = vsyncpa [#allocation3], 1
    %931 = vsyncpa [#allocation5], 1

</llo_original>
